<compile_context>
chip_gen: v6e
topology: v6e:2x2x1
jax: 0.10.0
libtpu: 0.0.40
codegen_flags: <defaults>
</compile_context>

<pallas_src>
import functools
import math

import jax
import jax.numpy as jnp
from jax.experimental import pallas as pl
from jax.experimental.pallas import tpu as pltpu


def _round_up(x, m):
    return ((x + m - 1) // m) * m


def _make_panel_kernel(*, perturbed, eps, neg_slope=0.01):
    """One bipartite propagation panel: out = noise_perturb(adj_block @ ego_other).

    All rows of a panel are either all user rows or all item rows, so a single
    Distribution_aware_Noise parameter set applies to the whole panel -> no
    per-tile parameter selection (and no program_id) inside the epilogue.
    """

    def kernel(adj_ref, ego_ref, wt_ref, b_ref, s_ref, sh_ref,
               out_ref, out_bf16_ref):
        k = pl.program_id(1)

        @pl.when(k == 0)
        def _():
            out_ref[...] = jnp.zeros_like(out_ref)

        # Dense propagation matmul: bf16 operands, f32 accumulation on the MXU.
        # The output block index is independent of k, so out_ref is resident in
        # VMEM across the contraction axis and acts as the accumulator.
        out_ref[...] += jnp.dot(adj_ref[...], ego_ref[...],
                                preferred_element_type=jnp.float32)

        @pl.when(k == pl.num_programs(1) - 1)
        def _():
            ego_k = out_ref[...]                                   # (tm, dp) f32
            if perturbed:
                # ---- Distribution_aware_Noise (eval mode) ----
                # Linear (weight pre-transposed, bf16 operands, f32 accumulation)
                z = jnp.dot(ego_k.astype(jnp.bfloat16), wt_ref[...],
                            preferred_element_type=jnp.float32) + b_ref[...]
                # LeakyReLU (default negative_slope = 0.01)
                z = jnp.where(z >= 0, z, neg_slope * z)
                # BatchNorm1d (eval) folded to scale/shift; Dropout == identity (eval)
                z = z * s_ref[...] + sh_ref[...]
                # F.normalize(dim=-1) via rsqrt on the EUP, eps folded into the scale
                sumsq = jnp.sum(z * z, axis=-1, keepdims=True)
                noise = z * (eps * jax.lax.rsqrt(jnp.maximum(sumsq, 1e-24)))
                # ego + sign(ego) * normalize(noise) * eps  (padded rows stay 0: sign(0)=0)
                ego_k = ego_k + jnp.sign(ego_k) * noise
                out_ref[...] = ego_k
            # bf16 copy consumed by the next layer's contraction operand
            # (avoids a separate O(N*D) cast pass in the wrapper).
            out_bf16_ref[...] = ego_k.astype(jnp.bfloat16)

    return kernel


def _build_panel_call(rows, cols, dp, tm, tk, perturbed, eps):
    kernel = _make_panel_kernel(perturbed=perturbed, eps=eps)
    grid = (rows // tm, cols // tk)
    const = lambda i, k: (0, 0)

    in_specs = [
        pl.BlockSpec((tm, tk), lambda i, k: (i, k)),   # adj bipartite block tile (bf16)
        pl.BlockSpec((tk, dp), lambda i, k: (k, 0)),   # ego contraction tile (bf16)
        pl.BlockSpec((dp, dp), const),                 # W^T      (resident, bf16)
        pl.BlockSpec((1, dp), const),                  # bias     (f32)
        pl.BlockSpec((1, dp), const),                  # bn scale (f32)
        pl.BlockSpec((1, dp), const),                  # bn shift (f32)
    ]
    out_specs = (pl.BlockSpec((tm, dp), lambda i, k: (i, 0)),   # f32 ego (layer output)
                 pl.BlockSpec((tm, dp), lambda i, k: (i, 0)))   # bf16 ego (next layer)

    return pl.pallas_call(
        kernel,
        out_shape=(jax.ShapeDtypeStruct((rows, dp), jnp.float32),
                   jax.ShapeDtypeStruct((rows, dp), jnp.bfloat16)),
        grid_spec=pltpu.PrefetchScalarGridSpec(
            num_scalar_prefetch=0,
            grid=grid,
            in_specs=in_specs,
            out_specs=out_specs),
        compiler_params=pltpu.CompilerParams(
            # Row tiles are independent -> megacore-shardable; contraction axis
            # carries the resident output block -> arbitrary.
            dimension_semantics=("parallel", "arbitrary")),
    )


def dahnrec_encoder_forward(norm_adj, user_emb, item_emb,
                            noise_params_user, noise_params_item,
                            *, n_layers, layer_cl, eps, perturbed,
                            tm=512, tk=2048):
    """Tiled Pallas forward (eval mode).

    tm / tk: row / contraction tile sizes.  Defaults sized for the HBM-bound regime
    (large tiles amortize per-step pipeline overhead).  On v7x keep the working set
    (2 * tm*tk + 2 * tk*dp bf16 + out buffers) well under its 64 MiB VMEM; on
    v5e/v6e larger tk (or resident ego via vmem_limit_bytes) is profitable.
    """
    user_num, emb = user_emb.shape
    item_num = item_emb.shape[0]

    dp = _round_up(emb, 128)                    # lane-dense embedding dimension
    tile = math.lcm(tm, tk)                     # each block serves as rows AND contraction
    mu = _round_up(user_num, tile)
    mi = _round_up(item_num, tile)

    # Only the bipartite blocks of the LightGCN-style norm_adj are kept (user-user /
    # item-item blocks are structurally zero).  Built directly in bf16 -> no dense
    # f32 (N, N) padded intermediate, and half the previous adjacency HBM footprint.
    adj = jnp.asarray(norm_adj)
    adj_ui = jnp.zeros((mu, mi), jnp.bfloat16)
    adj_ui = adj_ui.at[:user_num, :item_num].set(
        adj[:user_num, user_num:].astype(jnp.bfloat16))
    adj_iu = jnp.zeros((mi, mu), jnp.bfloat16)
    adj_iu = adj_iu.at[:item_num, :user_num].set(
        adj[user_num:, :user_num].astype(jnp.bfloat16))

    def pad_emb(x, rows):
        out = jnp.zeros((rows, dp), jnp.float32)
        return out.at[:x.shape[0], :emb].set(jnp.asarray(x, jnp.float32))

    ego_u = pad_emb(user_emb, mu)
    ego_i = pad_emb(item_emb, mi)
    ego_u_bf16 = ego_u.astype(jnp.bfloat16)
    ego_i_bf16 = ego_i.astype(jnp.bfloat16)

    def fold(p):
        # Linear weight (D, D) [torch (out,in) layout], bias (D,),
        # BN gamma/beta/running_mean/running_var (D,)
        w, b, gamma, beta, rmean, rvar = [jnp.asarray(t, jnp.float32) for t in p]
        scale = gamma / jnp.sqrt(rvar + 1e-5)
        shift = beta - rmean * scale
        wt = jnp.zeros((dp, dp), jnp.float32).at[:emb, :emb].set(jnp.transpose(w))
        bp = jnp.zeros((1, dp), jnp.float32).at[0, :emb].set(b)
        sp = jnp.zeros((1, dp), jnp.float32).at[0, :emb].set(scale)
        shp = jnp.zeros((1, dp), jnp.float32).at[0, :emb].set(shift)
        return wt.astype(jnp.bfloat16), bp, sp, shp

    params_u = fold(noise_params_user)
    params_i = fold(noise_params_item)

    user_call = _build_panel_call(mu, mi, dp, tm, tk, perturbed, float(eps))
    item_call = _build_panel_call(mi, mu, dp, tm, tk, perturbed, float(eps))

    acc_u = jnp.zeros_like(ego_u)
    acc_i = jnp.zeros_like(ego_i)
    cl_u, cl_i = ego_u, ego_i
    # Per-layer panel calls; acc / cl updates are O(N*D) elementwise, negligible vs.
    # the O(user*item*D) propagation matmuls.
    for k in range(n_layers):
        new_u, new_u_bf16 = user_call(adj_ui, ego_i_bf16, *params_u)
        new_i, new_i_bf16 = item_call(adj_iu, ego_u_bf16, *params_i)
        ego_u, ego_u_bf16 = new_u, new_u_bf16
        ego_i, ego_i_bf16 = new_i, new_i_bf16
        acc_u = acc_u + ego_u
        acc_i = acc_i + ego_i
        if k == layer_cl - 1:
            cl_u, cl_i = ego_u, ego_i

    final_u = acc_u[:user_num, :emb] / float(n_layers)
    final_i = acc_i[:item_num, :emb] / float(n_layers)
    if perturbed:
        return final_u, final_i, cl_u[:user_num, :emb], cl_i[:item_num, :emb]
    return final_u, final_i


# ----------------------------- reference / test harness -----------------------------

def _reference_forward(norm_adj, user_emb, item_emb, pu, pi,
                       *, n_layers, layer_cl, eps, perturbed):
    """Pure-JAX f32 reference of the same eval-mode forward."""
    user_num = user_emb.shape[0]
    ego = jnp.concatenate([user_emb, item_emb], 0).astype(jnp.float32)
    adj = jnp.asarray(norm_adj, jnp.float32)

    def fold(p):
        w, b, g, bt, rm, rv = [jnp.asarray(t, jnp.float32) for t in p]
        s = g / jnp.sqrt(rv + 1e-5)
        return jnp.transpose(w), b, s, bt - rm * s

    wu, bu, su, shu = fold(pu)
    wi, bi, si, shi = fold(pi)

    def noise(x, w, b, s, sh):
        z = x @ w + b
        z = jnp.where(z >= 0, z, 0.01 * z)
        z = z * s + sh
        n = jnp.maximum(jnp.sqrt(jnp.sum(z * z, -1, keepdims=True)), 1e-12)
        return z / n

    acc = jnp.zeros_like(ego)
    cl = ego
    for k in range(n_layers):
        ego = adj @ ego
        if perturbed:
            nu = noise(ego[:user_num], wu, bu, su, shu)
            ni = noise(ego[user_num:], wi, bi, si, shi)
            ego = ego + jnp.sign(ego) * jnp.concatenate([nu, ni], 0) * eps
        acc = acc + ego
        if k == layer_cl - 1:
            cl = ego
    final = acc / n_layers
    if perturbed:
        return final[:user_num], final[user_num:], cl[:user_num], cl[user_num:]
    return final[:user_num], final[user_num:]


def _build_norm_adj(key, user_num, item_num):
    """Deterministic symmetric-normalized bipartite adjacency (dense)."""
    r = (jax.random.uniform(key, (user_num, item_num)) < 0.2).astype(jnp.float32)
    N = user_num + item_num
    adj = jnp.zeros((N, N), jnp.float32)
    adj = adj.at[:user_num, user_num:].set(r)
    adj = adj.at[user_num:, :user_num].set(r.T)
    deg = jnp.sum(adj, axis=1)
    d_inv_sqrt = jnp.where(deg > 0, 1.0 / jnp.sqrt(jnp.maximum(deg, 1e-12)), 0.0)
    return adj * d_inv_sqrt[:, None] * d_inv_sqrt[None, :]


def _init_noise_generator(key, emb):
    """nn.Linear(emb, emb) + BatchNorm1d(emb) parameters (deterministic)."""
    kw, kb = jax.random.split(key)
    bound = (6.0 / (emb + emb)) ** 0.5
    w = jax.random.uniform(kw, (emb, emb), minval=-bound, maxval=bound)
    lin_bound = 1.0 / (emb ** 0.5)
    b = jax.random.uniform(kb, (emb,), minval=-lin_bound, maxval=lin_bound)
    gamma = jnp.ones((emb,), jnp.float32)
    beta = jnp.zeros((emb,), jnp.float32)
    rmean = jnp.zeros((emb,), jnp.float32)
    rvar = jnp.ones((emb,), jnp.float32)
    return (w, b, gamma, beta, rmean, rvar)


if __name__ == "__main__":
    user_num, item_num, emb_size = 24, 40, 32
    n_layers, layer_cl, eps = 2, 1, 0.1

    key = jax.random.PRNGKey(0)
    k_adj, k_u, k_i, k_nu, k_ni = jax.random.split(key, 5)

    norm_adj = _build_norm_adj(k_adj, user_num, item_num)

    bound = (6.0 / (2 * emb_size)) ** 0.5
    user_emb = jax.random.uniform(k_u, (user_num, emb_size), minval=-bound, maxval=bound)
    item_emb = jax.random.uniform(k_i, (item_num, emb_size), minval=-bound, maxval=bound)

    noise_params_user = _init_noise_generator(k_nu, emb_size)
    noise_params_item = _init_noise_generator(k_ni, emb_size)

    fwd = functools.partial(
        dahnrec_encoder_forward,
        norm_adj, user_emb, item_emb, noise_params_user, noise_params_item,
        n_layers=n_layers, layer_cl=layer_cl, eps=eps,
        tm=128, tk=128)          # small tiles for the tiny test shapes
    ref = functools.partial(
        _reference_forward,
        norm_adj, user_emb, item_emb, noise_params_user, noise_params_item,
        n_layers=n_layers, layer_cl=layer_cl, eps=eps)

    # perturbed=False path
    u_all, i_all = fwd(perturbed=False)
    jax.block_until_ready((u_all, i_all))
    ru, ri = ref(perturbed=False)
    assert u_all.shape == (user_num, emb_size) and i_all.shape == (item_num, emb_size)
    assert float(jnp.max(jnp.abs(u_all - ru))) < 2e-2
    assert float(jnp.max(jnp.abs(i_all - ri))) < 2e-2

    # perturbed=True path (contrastive-learning branch)
    u_all_p, i_all_p, u_cl, i_cl = fwd(perturbed=True)
    jax.block_until_ready((u_all_p, i_all_p, u_cl, i_cl))
    rup, rip, rucl, ricl = ref(perturbed=True)
    assert u_cl.shape == (user_num, emb_size) and i_cl.shape == (item_num, emb_size)
    assert float(jnp.max(jnp.abs(u_all_p - rup))) < 2e-2
    assert float(jnp.max(jnp.abs(i_all_p - rip))) < 2e-2
    assert float(jnp.max(jnp.abs(u_cl - rucl))) < 2e-2
    assert float(jnp.max(jnp.abs(i_cl - ricl))) < 2e-2

    print("KERNEL_OK")
</pallas_src>

<mosaic_0001>
module attributes {stable_mosaic.version = 11 : i64} {
  func.func @kernel(%arg0: i32, %arg1: i32, %arg2: memref<128x128xbf16, #tpu.memory_space<vmem>>, %arg3: memref<128x128xbf16, #tpu.memory_space<vmem>>, %arg4: memref<128x128xbf16, #tpu.memory_space<vmem>>, %arg5: memref<1x128xf32, #tpu.memory_space<vmem>>, %arg6: memref<1x128xf32, #tpu.memory_space<vmem>>, %arg7: memref<1x128xf32, #tpu.memory_space<vmem>>, %arg8: memref<128x128xf32, #tpu.memory_space<vmem>>, %arg9: memref<128x128xbf16, #tpu.memory_space<vmem>>) attributes {dimension_semantics = [#tpu.dimension_semantics<parallel>, #tpu.dimension_semantics<arbitrary>], iteration_bounds = array<i64: 1, 1>, scalar_prefetch = 0 : i64, scratch_operands = 0 : i64, tpu.core_type = #tpu.core_type<tc>, window_params = [{transform_indices = @transform_0, window_bounds = array<i64: 128, 128>}, {transform_indices = @transform_1, window_bounds = array<i64: 128, 128>}, {pipeline_mode = #tpu.pipeline_mode<synchronous>, transform_indices = @transform_2, window_bounds = array<i64: 128, 128>}, {pipeline_mode = #tpu.pipeline_mode<synchronous>, transform_indices = @transform_3, window_bounds = array<i64: 1, 128>}, {pipeline_mode = #tpu.pipeline_mode<synchronous>, transform_indices = @transform_4, window_bounds = array<i64: 1, 128>}, {pipeline_mode = #tpu.pipeline_mode<synchronous>, transform_indices = @transform_5, window_bounds = array<i64: 1, 128>}, {transform_indices = @transform_6, window_bounds = array<i64: 128, 128>}, {transform_indices = @transform_7, window_bounds = array<i64: 128, 128>}]} {
    %c0_i32 = arith.constant 0 : i32
    %0 = arith.cmpi eq, %arg1, %c0_i32 : i32
    %1 = arith.extui %0 : i1 to i32
    %c0_i32_0 = arith.constant 0 : i32
    %2 = arith.cmpi ne, %1, %c0_i32_0 : i32
    scf.if %2 {
      %cst_10 = arith.constant 0.000000e+00 : f32
      %12 = vector.broadcast %cst_10 : f32 to vector<128x128xf32>
      %c0_11 = arith.constant 0 : index
      %c0_12 = arith.constant 0 : index
      %13 = vector.load %arg8[%c0_11, %c0_12] : memref<128x128xf32, #tpu.memory_space<vmem>>, vector<128x128xf32>
      tpu.vector_store %arg8[%c0_11, %c0_12], %12 {strides = array<i32>} : memref<128x128xf32, #tpu.memory_space<vmem>>, vector<128x128xf32>,
    } else {
    }
    %c0 = arith.constant 0 : index
    %c0_1 = arith.constant 0 : index
    %3 = vector.load %arg8[%c0, %c0_1] : memref<128x128xf32, #tpu.memory_space<vmem>>, vector<128x128xf32>
    %c0_2 = arith.constant 0 : index
    %c0_3 = arith.constant 0 : index
    %4 = vector.load %arg2[%c0_2, %c0_3] : memref<128x128xbf16, #tpu.memory_space<vmem>>, vector<128x128xbf16>
    %c0_4 = arith.constant 0 : index
    %c0_5 = arith.constant 0 : index
    %5 = vector.load %arg3[%c0_4, %c0_5] : memref<128x128xbf16, #tpu.memory_space<vmem>>, vector<128x128xbf16>
    %cst = arith.constant dense<0.000000e+00> : vector<128x128xf32>
    %6 = tpu.matmul %4, %5, %cst {dimension_numbers = #tpu.dot_dimension_numbers<[1], [0], [0], [1], [0, 0, 1, 1], [], []>} : vector<128x128xbf16>, vector<128x128xbf16>, vector<128x128xf32> -> vector<128x128xf32>
    %7 = arith.addf %3, %6 : vector<128x128xf32>
    %c0_6 = arith.constant 0 : index
    %c0_7 = arith.constant 0 : index
    %8 = vector.load %arg8[%c0_6, %c0_7] : memref<128x128xf32, #tpu.memory_space<vmem>>, vector<128x128xf32>
    tpu.vector_store %arg8[%c0_6, %c0_7], %7 {strides = array<i32>} : memref<128x128xf32, #tpu.memory_space<vmem>>, vector<128x128xf32>,
    %c0_i32_8 = arith.constant 0 : i32
    %9 = arith.cmpi eq, %arg1, %c0_i32_8 : i32
    %10 = arith.extui %9 : i1 to i32
    %c0_i32_9 = arith.constant 0 : i32
    %11 = arith.cmpi ne, %10, %c0_i32_9 : i32
    scf.if %11 {
      %c0_10 = arith.constant 0 : index
      %c0_11 = arith.constant 0 : index
      %12 = vector.load %arg8[%c0_10, %c0_11] : memref<128x128xf32, #tpu.memory_space<vmem>>, vector<128x128xf32>
      %13 = arith.truncf %12 : vector<128x128xf32> to vector<128x128xbf16>
      %c0_12 = arith.constant 0 : index
      %c0_13 = arith.constant 0 : index
      %14 = vector.load %arg9[%c0_12, %c0_13] : memref<128x128xbf16, #tpu.memory_space<vmem>>, vector<128x128xbf16>
      tpu.vector_store %arg9[%c0_12, %c0_13], %13 {strides = array<i32>} : memref<128x128xbf16, #tpu.memory_space<vmem>>, vector<128x128xbf16>,
    } else {
    }
    return
  }
  func.func @transform_0(%arg0: i32, %arg1: i32) -> (i32, i32) {
    %c0_i32 = arith.constant 0 : i32
    return %arg0, %arg1 : i32, i32
  }
  func.func @transform_1(%arg0: i32, %arg1: i32) -> (i32, i32) {
    %c0_i32 = arith.constant 0 : i32
    %c0_i32_0 = arith.constant 0 : i32
    return %arg1, %c0_i32 : i32, i32
  }
  func.func @transform_2(%arg0: i32, %arg1: i32) -> (i32, i32) {
    %c0_i32 = arith.constant 0 : i32
    %c0_i32_0 = arith.constant 0 : i32
    %c0_i32_1 = arith.constant 0 : i32
    return %c0_i32, %c0_i32_0 : i32, i32
  }
  func.func @transform_3(%arg0: i32, %arg1: i32) -> (i32, i32) {
    %c0_i32 = arith.constant 0 : i32
    %c0_i32_0 = arith.constant 0 : i32
    %c0_i32_1 = arith.constant 0 : i32
    return %c0_i32, %c0_i32_0 : i32, i32
  }
  func.func @transform_4(%arg0: i32, %arg1: i32) -> (i32, i32) {
    %c0_i32 = arith.constant 0 : i32
    %c0_i32_0 = arith.constant 0 : i32
    %c0_i32_1 = arith.constant 0 : i32
    return %c0_i32, %c0_i32_0 : i32, i32
  }
  func.func @transform_5(%arg0: i32, %arg1: i32) -> (i32, i32) {
    %c0_i32 = arith.constant 0 : i32
    %c0_i32_0 = arith.constant 0 : i32
    %c0_i32_1 = arith.constant 0 : i32
    return %c0_i32, %c0_i32_0 : i32, i32
  }
  func.func @transform_6(%arg0: i32, %arg1: i32) -> (i32, i32) {
    %c0_i32 = arith.constant 0 : i32
    %c0_i32_0 = arith.constant 0 : i32
    return %arg0, %c0_i32 : i32, i32
  }
  func.func @transform_7(%arg0: i32, %arg1: i32) -> (i32, i32) {
    %c0_i32 = arith.constant 0 : i32
    %c0_i32_0 = arith.constant 0 : i32
    return %arg0, %c0_i32 : i32, i32
  }
}

</mosaic_0001>

<llo_original>
// kernel: tpu_custom_call.1
$region0: #{tpu_custom_call.1}
  #allocation0 [shape = 'u32[]', space=smem, size = 0x4, offset = 0x4, fixed_abs, tag = 'smem constant byte address 0x4 - core index']
  #allocation1 [shape = 'u32[144,128]{1,0:T(1,128)}', space=vmem, size = 0x12000, scoped, tag = 'internal scratch']
  %s0 = inlined_call_operand.hbm [shape: bf16[128,128], index: 0, kind: input, shape index: {}]
  %s1 = inlined_call_operand.hbm [shape: bf16[128,128], index: 1, kind: input, shape index: {}]
  %s2 = inlined_call_operand.hbm [shape: bf16[128,128], index: 2, kind: input, shape index: {}]
  %s3 = inlined_call_operand.vmem [shape: f32[1,128], index: 3, kind: input, shape index: {}]
  %s4 = inlined_call_operand.vmem [shape: f32[1,128], index: 4, kind: input, shape index: {}]
  %s5 = inlined_call_operand.vmem [shape: f32[1,128], index: 5, kind: input, shape index: {}]
  %s6 = inlined_call_operand.hbm [shape: f32[128,128], index: 6, kind: output, shape index: {0}]
  %s7 = inlined_call_operand.hbm [shape: bf16[128,128], index: 7, kind: output, shape index: {1}]
  %8 = xla_tuple %s6, %s7
  %s9 = sld [smem:[#allocation0]]
  $region62: #{tpu_custom_call.1} parent=0
    _
  %s11 = ssub.s32 1, %s9
  %s12 = scalar_select 0, %s11, %s9
  $region1: #{tpu_custom_call.1} parent=0
    #allocation2 [shape = 'u8[32768]{0}', space=vmem, size = 0x8000, scoped, tag = 'input window, operand 0, single buffered']
    #allocation3 [shape = 's32[1]{0}', space=sflag, size = 0x4, scoped, tag = 'scoped memory for tpu_custom_call.1']
    #allocation4 [shape = 's32[1]{0}', space=sflag, size = 0x4, scoped, tag = 'scoped memory for tpu_custom_call.1']
    #allocation5 [shape = 'u8[32768]{0}', space=vmem, size = 0x8000, scoped, tag = 'input window, operand 1, single buffered']
    #allocation6 [shape = 's32[1]{0}', space=sflag, size = 0x4, scoped, tag = 'scoped memory for tpu_custom_call.1']
    #allocation7 [shape = 'u8[32768]{0}', space=vmem, size = 0x8000, scoped, tag = 'input window, operand 2, single buffered']
    #allocation8 [shape = 'u8[65536]{0}', space=vmem, size = 0x10000, scoped, tag = 'output window, operand 0, single buffered']
    #allocation9 [shape = 'u8[32768]{0}', space=vmem, size = 0x8000, scoped, tag = 'output window, operand 1, single buffered']
    #allocation10 [shape = 's32[1]{0}', space=sflag, size = 0x4, scoped, tag = 'scoped memory for tpu_custom_call.1']
    %13 = vsyncpa [#allocation3], 0
    %14 = vsyncpa [#allocation6], 0
    %15 = vsyncpa [#allocation4], 0
    %16 = vsyncpa [#allocation10], 0
    // Predicated region
    $region2: #{tpu_custom_call.1} parent=1 // pred_check
      _
    $region3: #{tpu_custom_call.1} parent=1 // pred_check_branch
      %18 = sbr.rel (0) target = $region5
    $region4: #{tpu_custom_call.1} parent=1 // pred_region
      %s20 = ssub.s32 1024, 1024
      %21 = vsyncadd [#allocation3], %s20
      %s22 = sshll.u32 [#allocation2], 4
      %s23 = int_to_ptr.vmem [resolvable:$true] %s22
      %28 = dma.hbm_to_vmem [thread:$0]  %s0, 1024, %s23, [#allocation3], 64, 64, 4
    $region5: #{tpu_custom_call.1} parent=1 // pred_fallthru
      _
    // Predicated region
    $region6: #{tpu_custom_call.1} parent=1 // pred_check
      _
    $region7: #{tpu_custom_call.1} parent=1 // pred_check_branch
      %30 = sbr.rel (0) target = $region9
    $region8: #{tpu_custom_call.1} parent=1 // pred_region
      %s32 = ssub.s32 1024, 1024
      %33 = vsyncadd [#allocation6], %s32
      %s34 = sshll.u32 [#allocation5], 4
      %s35 = int_to_ptr.vmem [resolvable:$true] %s34
      %40 = dma.hbm_to_vmem [thread:$0]  %s1, 1024, %s35, [#allocation6], 64, 64, 4
    $region9: #{tpu_custom_call.1} parent=1 // pred_fallthru
      _
    // Predicated region
    $region10: #{tpu_custom_call.1} parent=1 // pred_check
      _
    $region11: #{tpu_custom_call.1} parent=1 // pred_check_branch
      %42 = sbr.rel (0) target = $region13
    $region12: #{tpu_custom_call.1} parent=1 // pred_region
      %s44 = ssub.s32 1024, 1024
      %45 = vsyncadd [#allocation6], %s44
      %s46 = sshll.u32 [#allocation7], 4
      %s47 = int_to_ptr.vmem [resolvable:$true] %s46
      %52 = dma.hbm_to_vmem [thread:$0]  %s2, 1024, %s47, [#allocation6], 64, 64, 4
    $region13: #{tpu_custom_call.1} parent=1 // pred_fallthru
      _
    // Predicated region
    $region14: #{tpu_custom_call.1} parent=1 // pred_check
      _
    $region15: #{tpu_custom_call.1} parent=1 // pred_check_branch
      %54 = sbr.rel (0) target = $region17
    $region16: #{tpu_custom_call.1} parent=1 // pred_region
      _
    $region17: #{tpu_custom_call.1} parent=1 // pred_fallthru
      _
    // Predicated region
    $region18: #{tpu_custom_call.1} parent=1 // pred_check
      _
    $region19: #{tpu_custom_call.1} parent=1 // pred_check_branch
      %56 = sbr.rel (0) target = $region21
    $region20: #{tpu_custom_call.1} parent=1 // pred_region
      _
    $region21: #{tpu_custom_call.1} parent=1 // pred_fallthru
      _
    // Predicated region
    $region22: #{tpu_custom_call.1} parent=1 // pred_check
      _
    $region23: #{tpu_custom_call.1} parent=1 // pred_check_branch
      %58 = sbr.rel (0) target = $region25
    $region24: #{tpu_custom_call.1} parent=1 // pred_region
      _
    $region25: #{tpu_custom_call.1} parent=1 // pred_fallthru
      _
    // Predicated region
    $region26: #{tpu_custom_call.1} parent=1 // pred_check
      _
    $region27: #{tpu_custom_call.1} parent=1 // pred_check_branch
      %60 = sbr.rel (0) target = $region29
    $region28: #{tpu_custom_call.1} parent=1 // pred_region
      %61 = dma.done [#allocation3], 1024
    $region29: #{tpu_custom_call.1} parent=1 // pred_fallthru
      _
    // Predicated region
    $region30: #{tpu_custom_call.1} parent=1 // pred_check
      _
    $region31: #{tpu_custom_call.1} parent=1 // pred_check_branch
      %63 = sbr.rel (0) target = $region33
    $region32: #{tpu_custom_call.1} parent=1 // pred_region
      %64 = dma.done [#allocation6], 1024
    $region33: #{tpu_custom_call.1} parent=1 // pred_fallthru
      _
    // Predicated region
    $region34: #{tpu_custom_call.1} parent=1 // pred_check
      _
    $region35: #{tpu_custom_call.1} parent=1 // pred_check_branch
      %66 = sbr.rel (0) target = $region37
    $region36: #{tpu_custom_call.1} parent=1 // pred_region
      %67 = dma.done [#allocation6], 1024
    $region37: #{tpu_custom_call.1} parent=1 // pred_fallthru
      _
    %p69 = scmp.eq.s32.totalorder 0, 0
    // Predicated region
    $region38: #{tpu_custom_call.1} parent=1 // pred_check
      %p70 = pneg %p69
    $region39: #{tpu_custom_call.1} parent=1 // pred_check_branch
      %72 = sbr.rel (%p70) target = $region41
    $region40: #{tpu_custom_call.1} parent=1 // pred_region
      %73 = vst [vmem:[#allocation8] sm:$0xff] 0.0
      %74 = vst [vmem:[#allocation8 + $0x8] sm:$0xff] 0.0
      %75 = vst [vmem:[#allocation8 + $0x10] sm:$0xff] 0.0
      %76 = vst [vmem:[#allocation8 + $0x18] sm:$0xff] 0.0
      %77 = vst [vmem:[#allocation8 + $0x20] sm:$0xff] 0.0
      %78 = vst [vmem:[#allocation8 + $0x28] sm:$0xff] 0.0
      %79 = vst [vmem:[#allocation8 + $0x30] sm:$0xff] 0.0
      %80 = vst [vmem:[#allocation8 + $0x38] sm:$0xff] 0.0
      %81 = vst [vmem:[#allocation8 + $0x40] sm:$0xff] 0.0
      %82 = vst [vmem:[#allocation8 + $0x48] sm:$0xff] 0.0
      %83 = vst [vmem:[#allocation8 + $0x50] sm:$0xff] 0.0
      %84 = vst [vmem:[#allocation8 + $0x58] sm:$0xff] 0.0
      %85 = vst [vmem:[#allocation8 + $0x60] sm:$0xff] 0.0
      %86 = vst [vmem:[#allocation8 + $0x68] sm:$0xff] 0.0
      %87 = vst [vmem:[#allocation8 + $0x70] sm:$0xff] 0.0
      %88 = vst [vmem:[#allocation8 + $0x78] sm:$0xff] 0.0
    $region41: #{tpu_custom_call.1} parent=1 // pred_fallthru
      _
    %v89 = vld [vmem:[#allocation8] sm:$0xff]
    %v90 = vld [vmem:[#allocation8 + $0x8] sm:$0xff]
    %v91 = vld [vmem:[#allocation8 + $0x10] sm:$0xff]
    %v92 = vld [vmem:[#allocation8 + $0x18] sm:$0xff]
    %v93 = vld [vmem:[#allocation8 + $0x20] sm:$0xff]
    %v94 = vld [vmem:[#allocation8 + $0x28] sm:$0xff]
    %v95 = vld [vmem:[#allocation8 + $0x30] sm:$0xff]
    %v96 = vld [vmem:[#allocation8 + $0x38] sm:$0xff]
    %v97 = vld [vmem:[#allocation8 + $0x40] sm:$0xff]
    %v98 = vld [vmem:[#allocation8 + $0x48] sm:$0xff]
    %v99 = vld [vmem:[#allocation8 + $0x50] sm:$0xff]
    %v100 = vld [vmem:[#allocation8 + $0x58] sm:$0xff]
    %v101 = vld [vmem:[#allocation8 + $0x60] sm:$0xff]
    %v102 = vld [vmem:[#allocation8 + $0x68] sm:$0xff]
    %v103 = vld [vmem:[#allocation8 + $0x70] sm:$0xff]
    %v104 = vld [vmem:[#allocation8 + $0x78] sm:$0xff]
    %v105 = vld [vmem:[#allocation2] sm:$0xf]
    %v106 = vld [vmem:[#allocation2 + $0x4] sm:$0xf]
    %v107 = vld [vmem:[#allocation2 + $0x8] sm:$0xf]
    %v108 = vld [vmem:[#allocation2 + $0xc] sm:$0xf]
    %v109 = vld [vmem:[#allocation2 + $0x10] sm:$0xf]
    %v110 = vld [vmem:[#allocation2 + $0x14] sm:$0xf]
    %v111 = vld [vmem:[#allocation2 + $0x18] sm:$0xf]
    %v112 = vld [vmem:[#allocation2 + $0x1c] sm:$0xf]
    %v113 = vld [vmem:[#allocation2 + $0x20] sm:$0xf]
    %v114 = vld [vmem:[#allocation2 + $0x24] sm:$0xf]
    %v115 = vld [vmem:[#allocation2 + $0x28] sm:$0xf]
    %v116 = vld [vmem:[#allocation2 + $0x2c] sm:$0xf]
    %v117 = vld [vmem:[#allocation2 + $0x30] sm:$0xf]
    %v118 = vld [vmem:[#allocation2 + $0x34] sm:$0xf]
    %v119 = vld [vmem:[#allocation2 + $0x38] sm:$0xf]
    %v120 = vld [vmem:[#allocation2 + $0x3c] sm:$0xf]
    %v121 = vld [vmem:[#allocation5] sm:$0xf]
    %v122 = vld [vmem:[#allocation5 + $0x4] sm:$0xf]
    %v123 = vld [vmem:[#allocation5 + $0x8] sm:$0xf]
    %v124 = vld [vmem:[#allocation5 + $0xc] sm:$0xf]
    %v125 = vld [vmem:[#allocation5 + $0x10] sm:$0xf]
    %v126 = vld [vmem:[#allocation5 + $0x14] sm:$0xf]
    %v127 = vld [vmem:[#allocation5 + $0x18] sm:$0xf]
    %v128 = vld [vmem:[#allocation5 + $0x1c] sm:$0xf]
    %v129 = vld [vmem:[#allocation5 + $0x20] sm:$0xf]
    %v130 = vld [vmem:[#allocation5 + $0x24] sm:$0xf]
    %v131 = vld [vmem:[#allocation5 + $0x28] sm:$0xf]
    %v132 = vld [vmem:[#allocation5 + $0x2c] sm:$0xf]
    %v133 = vld [vmem:[#allocation5 + $0x30] sm:$0xf]
    %v134 = vld [vmem:[#allocation5 + $0x34] sm:$0xf]
    %v135 = vld [vmem:[#allocation5 + $0x38] sm:$0xf]
    %v136 = vld [vmem:[#allocation5 + $0x3c] sm:$0xf]
    %v153 = vunpack.c.l.b16 %v105
    %v154 = vunpack.c.l.b16 %v106
    %v155 = vunpack.c.l.b16 %v107
    %v156 = vunpack.c.l.b16 %v108
    %v157 = vunpack.c.l.b16 %v109
    %v158 = vunpack.c.l.b16 %v110
    %v159 = vunpack.c.l.b16 %v111
    %v160 = vunpack.c.l.b16 %v112
    %v161 = vunpack.c.l.b16 %v113
    %v162 = vunpack.c.l.b16 %v114
    %v163 = vunpack.c.l.b16 %v115
    %v164 = vunpack.c.l.b16 %v116
    %v165 = vunpack.c.l.b16 %v117
    %v166 = vunpack.c.l.b16 %v118
    %v167 = vunpack.c.l.b16 %v119
    %v168 = vunpack.c.l.b16 %v120
    %v169 = vpack.c.b16 %v154, %v153
    %v170 = vpack.c.b16 %v156, %v155
    %v171 = vpack.c.b16 %v158, %v157
    %v172 = vpack.c.b16 %v160, %v159
    %v173 = vpack.c.b16 %v162, %v161
    %v174 = vpack.c.b16 %v164, %v163
    %v175 = vpack.c.b16 %v166, %v165
    %v176 = vpack.c.b16 %v168, %v167
    %v201 = vunpack.c.l.b16 %v121
    %v202 = vunpack.c.l.b16 %v122
    %v203 = vunpack.c.l.b16 %v123
    %v204 = vunpack.c.l.b16 %v124
    %v205 = vunpack.c.l.b16 %v125
    %v206 = vunpack.c.l.b16 %v126
    %v207 = vunpack.c.l.b16 %v127
    %v208 = vunpack.c.l.b16 %v128
    %v209 = vunpack.c.l.b16 %v129
    %v210 = vunpack.c.l.b16 %v130
    %v211 = vunpack.c.l.b16 %v131
    %v212 = vunpack.c.l.b16 %v132
    %v213 = vunpack.c.l.b16 %v133
    %v214 = vunpack.c.l.b16 %v134
    %v215 = vunpack.c.l.b16 %v135
    %v216 = vunpack.c.l.b16 %v136
    %v217 = vpack.c.b16 %v202, %v201
    %v218 = vpack.c.b16 %v204, %v203
    %v219 = vpack.c.b16 %v206, %v205
    %v220 = vpack.c.b16 %v208, %v207
    %v221 = vpack.c.b16 %v210, %v209
    %v222 = vpack.c.b16 %v212, %v211
    %v223 = vpack.c.b16 %v214, %v213
    %v224 = vpack.c.b16 %v216, %v215
    %233 = vmatprep.subr.bf16.mxu0 0
    %234 = vmatpush1.bf16.msra.mxu0 %v224
    %235 = vmatprep.subr.bf16.mxu0 0
    %236 = vmatpush1.bf16.msra.mxu0 %v223
    %237 = vmatprep.subr.bf16.mxu0 0
    %238 = vmatpush1.bf16.msra.mxu0 %v222
    %239 = vmatprep.subr.bf16.mxu0 0
    %240 = vmatpush1.bf16.msra.mxu0 %v221
    %241 = vmatprep.subr.bf16.mxu0 0
    %242 = vmatpush1.bf16.msra.mxu0 %v220
    %243 = vmatprep.subr.bf16.mxu0 0
    %244 = vmatpush1.bf16.msra.mxu0 %v219
    %245 = vmatprep.subr.bf16.mxu0 0
    %246 = vmatpush1.bf16.msra.mxu0 %v218
    %247 = vmatprep.subr.bf16.mxu0 0
    %248 = vmatpush1.bf16.msra.mxu0 %v217
    %249 = vmatprep.subr.bf16.mxu0 0
    %250 = vmatpush2.bf16.msra.mxu0 0
    %251 = vmatprep.subr.bf16.mxu0 0
    %252 = vmatpush2.bf16.msra.mxu0 0
    %253 = vmatprep.subr.bf16.mxu0 0
    %254 = vmatpush2.bf16.msra.mxu0 0
    %255 = vmatprep.subr.bf16.mxu0 0
    %256 = vmatpush2.bf16.msra.mxu0 0
    %257 = vmatprep.subr.bf16.mxu0 0
    %258 = vmatpush2.bf16.msra.mxu0 0
    %259 = vmatprep.subr.bf16.mxu0 0
    %260 = vmatpush2.bf16.msra.mxu0 0
    %261 = vmatprep.subr.bf16.mxu0 0
    %262 = vmatpush2.bf16.msra.mxu0 0
    %263 = vmatprep.subr.bf16.mxu0 0
    %264 = vmatpush2.bf16.msra.mxu0 0
    %265 = vmatprep.mubr.bf16.mxu0 0
    %266 = vmatmul.mubr.bf16.gmra.mxu0 %v169
    %v267 = vpop.f32.mrf.mxu0
    %v268 = vadd.f32 0.0, %v267
    %v269 = vpop.f32.mrf.mxu0
    %v270 = vpop.f32.mrf.mxu0
    %v271 = vadd.f32 0.0, %v270
    %v272 = vpop.f32.mrf.mxu0
    %273 = vmatprep.mubr.bf16.mxu0 0
    %274 = vmatmul.mubr.bf16.gmra.mxu0 %v170
    %v275 = vpop.f32.mrf.mxu0
    %v276 = vadd.f32 0.0, %v275
    %v277 = vpop.f32.mrf.mxu0
    %v278 = vpop.f32.mrf.mxu0
    %v279 = vadd.f32 0.0, %v278
    %v280 = vpop.f32.mrf.mxu0
    %281 = vmatprep.mubr.bf16.mxu0 0
    %282 = vmatmul.mubr.bf16.gmra.mxu0 %v171
    %v283 = vpop.f32.mrf.mxu0
    %v284 = vadd.f32 0.0, %v283
    %v285 = vpop.f32.mrf.mxu0
    %v286 = vpop.f32.mrf.mxu0
    %v287 = vadd.f32 0.0, %v286
    %v288 = vpop.f32.mrf.mxu0
    %289 = vmatprep.mubr.bf16.mxu0 0
    %290 = vmatmul.mubr.bf16.gmra.mxu0 %v172
    %v291 = vpop.f32.mrf.mxu0
    %v292 = vadd.f32 0.0, %v291
    %v293 = vpop.f32.mrf.mxu0
    %v294 = vpop.f32.mrf.mxu0
    %v295 = vadd.f32 0.0, %v294
    %v296 = vpop.f32.mrf.mxu0
    %297 = vmatprep.mubr.bf16.mxu0 0
    %298 = vmatmul.mubr.bf16.gmra.mxu0 %v173
    %v299 = vpop.f32.mrf.mxu0
    %v300 = vadd.f32 0.0, %v299
    %v301 = vpop.f32.mrf.mxu0
    %v302 = vpop.f32.mrf.mxu0
    %v303 = vadd.f32 0.0, %v302
    %v304 = vpop.f32.mrf.mxu0
    %305 = vmatprep.mubr.bf16.mxu0 0
    %306 = vmatmul.mubr.bf16.gmra.mxu0 %v174
    %v307 = vpop.f32.mrf.mxu0
    %v308 = vadd.f32 0.0, %v307
    %v309 = vpop.f32.mrf.mxu0
    %v310 = vpop.f32.mrf.mxu0
    %v311 = vadd.f32 0.0, %v310
    %v312 = vpop.f32.mrf.mxu0
    %313 = vmatprep.mubr.bf16.mxu0 0
    %314 = vmatmul.mubr.bf16.gmra.mxu0 %v175
    %v315 = vpop.f32.mrf.mxu0
    %v316 = vadd.f32 0.0, %v315
    %v317 = vpop.f32.mrf.mxu0
    %v318 = vpop.f32.mrf.mxu0
    %v319 = vadd.f32 0.0, %v318
    %v320 = vpop.f32.mrf.mxu0
    %321 = vmatprep.mubr.bf16.mxu0 0
    %322 = vmatmul.mubr.bf16.gmra.mxu0 %v176
    %v323 = vpop.f32.mrf.mxu0
    %v324 = vadd.f32 0.0, %v323
    %v325 = vpop.f32.mrf.mxu0
    %v326 = vpop.f32.mrf.mxu0
    %v327 = vadd.f32 0.0, %v326
    %v328 = vpop.f32.mrf.mxu0
    %329 = vdwg.mxu0
    %v330 = vadd.f32 %v89, %v268
    %v331 = vadd.f32 %v90, %v271
    %v332 = vadd.f32 %v91, %v276
    %v333 = vadd.f32 %v92, %v279
    %v334 = vadd.f32 %v93, %v284
    %v335 = vadd.f32 %v94, %v287
    %v336 = vadd.f32 %v95, %v292
    %v337 = vadd.f32 %v96, %v295
    %v338 = vadd.f32 %v97, %v300
    %v339 = vadd.f32 %v98, %v303
    %v340 = vadd.f32 %v99, %v308
    %v341 = vadd.f32 %v100, %v311
    %v342 = vadd.f32 %v101, %v316
    %v343 = vadd.f32 %v102, %v319
    %v344 = vadd.f32 %v103, %v324
    %v345 = vadd.f32 %v104, %v327
    %346 = vst [vmem:[#allocation8] sm:$0xff] %v330
    %347 = vst [vmem:[#allocation8 + $0x8] sm:$0xff] %v331
    %348 = vst [vmem:[#allocation8 + $0x10] sm:$0xff] %v332
    %349 = vst [vmem:[#allocation8 + $0x18] sm:$0xff] %v333
    %350 = vst [vmem:[#allocation8 + $0x20] sm:$0xff] %v334
    %351 = vst [vmem:[#allocation8 + $0x28] sm:$0xff] %v335
    %352 = vst [vmem:[#allocation8 + $0x30] sm:$0xff] %v336
    %353 = vst [vmem:[#allocation8 + $0x38] sm:$0xff] %v337
    %354 = vst [vmem:[#allocation8 + $0x40] sm:$0xff] %v338
    %355 = vst [vmem:[#allocation8 + $0x48] sm:$0xff] %v339
    %356 = vst [vmem:[#allocation8 + $0x50] sm:$0xff] %v340
    %357 = vst [vmem:[#allocation8 + $0x58] sm:$0xff] %v341
    %358 = vst [vmem:[#allocation8 + $0x60] sm:$0xff] %v342
    %359 = vst [vmem:[#allocation8 + $0x68] sm:$0xff] %v343
    %360 = vst [vmem:[#allocation8 + $0x70] sm:$0xff] %v344
    %361 = vst [vmem:[#allocation8 + $0x78] sm:$0xff] %v345
    // Predicated region
    $region42: #{tpu_custom_call.1} parent=1 // pred_check
      %p362 = pneg %p69
    $region43: #{tpu_custom_call.1} parent=1 // pred_check_branch
      %364 = sbr.rel (%p362) target = $region45
    $region44: #{tpu_custom_call.1} parent=1 // pred_region
      %v365 = vld [vmem:[#allocation8] sm:$0xff]
      %v366 = vld [vmem:[#allocation8 + $0x8] sm:$0xff]
      %v367 = vld [vmem:[#allocation8 + $0x10] sm:$0xff]
      %v368 = vld [vmem:[#allocation8 + $0x18] sm:$0xff]
      %v369 = vld [vmem:[#allocation8 + $0x20] sm:$0xff]
      %v370 = vld [vmem:[#allocation8 + $0x28] sm:$0xff]
      %v371 = vld [vmem:[#allocation8 + $0x30] sm:$0xff]
      %v372 = vld [vmem:[#allocation8 + $0x38] sm:$0xff]
      %v373 = vld [vmem:[#allocation8 + $0x40] sm:$0xff]
      %v374 = vld [vmem:[#allocation8 + $0x48] sm:$0xff]
      %v375 = vld [vmem:[#allocation8 + $0x50] sm:$0xff]
      %v376 = vld [vmem:[#allocation8 + $0x58] sm:$0xff]
      %v377 = vld [vmem:[#allocation8 + $0x60] sm:$0xff]
      %v378 = vld [vmem:[#allocation8 + $0x68] sm:$0xff]
      %v379 = vld [vmem:[#allocation8 + $0x70] sm:$0xff]
      %v380 = vld [vmem:[#allocation8 + $0x78] sm:$0xff]
      %v381 = vpack.c.bf16 %v366, %v365
      %v382 = vpack.c.bf16 %v368, %v367
      %v383 = vpack.c.bf16 %v370, %v369
      %v384 = vpack.c.bf16 %v372, %v371
      %v385 = vpack.c.bf16 %v374, %v373
      %v386 = vpack.c.bf16 %v376, %v375
      %v387 = vpack.c.bf16 %v378, %v377
      %v388 = vpack.c.bf16 %v380, %v379
      %v397 = vunpack.c.l.b16 %v381
      %v398 = vunpack.c.h.b16 %v381
      %v399 = vunpack.c.l.b16 %v382
      %v400 = vunpack.c.h.b16 %v382
      %v401 = vunpack.c.l.b16 %v383
      %v402 = vunpack.c.h.b16 %v383
      %v403 = vunpack.c.l.b16 %v384
      %v404 = vunpack.c.h.b16 %v384
      %v405 = vunpack.c.l.b16 %v385
      %v406 = vunpack.c.h.b16 %v385
      %v407 = vunpack.c.l.b16 %v386
      %v408 = vunpack.c.h.b16 %v386
      %v409 = vunpack.c.l.b16 %v387
      %v410 = vunpack.c.h.b16 %v387
      %v411 = vunpack.c.l.b16 %v388
      %v412 = vunpack.c.h.b16 %v388
      %v413 = vpack.c.b16 %v397, %v397
      %v414 = vpack.c.b16 %v398, %v398
      %v415 = vpack.c.b16 %v399, %v399
      %v416 = vpack.c.b16 %v400, %v400
      %v417 = vpack.c.b16 %v401, %v401
      %v418 = vpack.c.b16 %v402, %v402
      %v419 = vpack.c.b16 %v403, %v403
      %v420 = vpack.c.b16 %v404, %v404
      %v421 = vpack.c.b16 %v405, %v405
      %v422 = vpack.c.b16 %v406, %v406
      %v423 = vpack.c.b16 %v407, %v407
      %v424 = vpack.c.b16 %v408, %v408
      %v425 = vpack.c.b16 %v409, %v409
      %v426 = vpack.c.b16 %v410, %v410
      %v427 = vpack.c.b16 %v411, %v411
      %v428 = vpack.c.b16 %v412, %v412
      %445 = vst [vmem:[#allocation9] sm:$0xf] %v413
      %446 = vst [vmem:[#allocation9 + $0x4] sm:$0xf] %v414
      %447 = vst [vmem:[#allocation9 + $0x8] sm:$0xf] %v415
      %448 = vst [vmem:[#allocation9 + $0xc] sm:$0xf] %v416
      %449 = vst [vmem:[#allocation9 + $0x10] sm:$0xf] %v417
      %450 = vst [vmem:[#allocation9 + $0x14] sm:$0xf] %v418
      %451 = vst [vmem:[#allocation9 + $0x18] sm:$0xf] %v419
      %452 = vst [vmem:[#allocation9 + $0x1c] sm:$0xf] %v420
      %453 = vst [vmem:[#allocation9 + $0x20] sm:$0xf] %v421
      %454 = vst [vmem:[#allocation9 + $0x24] sm:$0xf] %v422
      %455 = vst [vmem:[#allocation9 + $0x28] sm:$0xf] %v423
      %456 = vst [vmem:[#allocation9 + $0x2c] sm:$0xf] %v424
      %457 = vst [vmem:[#allocation9 + $0x30] sm:$0xf] %v425
      %458 = vst [vmem:[#allocation9 + $0x34] sm:$0xf] %v426
      %459 = vst [vmem:[#allocation9 + $0x38] sm:$0xf] %v427
      %460 = vst [vmem:[#allocation9 + $0x3c] sm:$0xf] %v428
    $region45: #{tpu_custom_call.1} parent=1 // pred_fallthru
      _
    // Predicated region
    $region46: #{tpu_custom_call.1} parent=1 // pred_check
      _
    $region47: #{tpu_custom_call.1} parent=1 // pred_check_branch
      %462 = sbr.rel (0) target = $region49
    $region48: #{tpu_custom_call.1} parent=1 // pred_region
      %s464 = ssub.s32 2048, 2048
      %465 = vsyncadd [#allocation4], %s464
      %s466 = sshll.u32 [#allocation8], 4
      %s467 = int_to_ptr.vmem [resolvable:$true] %s466
      %472 = dma.vmem_to_hbm [thread:$0]  %s467, 2048, %s6, [#allocation4], 128, 128, 8
    $region49: #{tpu_custom_call.1} parent=1 // pred_fallthru
      _
    // Predicated region
    $region50: #{tpu_custom_call.1} parent=1 // pred_check
      _
    $region51: #{tpu_custom_call.1} parent=1 // pred_check_branch
      %474 = sbr.rel (0) target = $region53
    $region52: #{tpu_custom_call.1} parent=1 // pred_region
      %s476 = ssub.s32 1024, 1024
      %477 = vsyncadd [#allocation10], %s476
      %s478 = sshll.u32 [#allocation9], 4
      %s479 = int_to_ptr.vmem [resolvable:$true] %s478
      %484 = dma.vmem_to_hbm [thread:$0]  %s479, 1024, %s7, [#allocation10], 64, 64, 4
    $region53: #{tpu_custom_call.1} parent=1 // pred_fallthru
      _
    // Predicated region
    $region54: #{tpu_custom_call.1} parent=1 // pred_check
      _
    $region55: #{tpu_custom_call.1} parent=1 // pred_check_branch
      %486 = sbr.rel (0) target = $region57
    $region56: #{tpu_custom_call.1} parent=1 // pred_region
      %487 = dma.done [#allocation4], 2048
    $region57: #{tpu_custom_call.1} parent=1 // pred_fallthru
      _
    // Predicated region
    $region58: #{tpu_custom_call.1} parent=1 // pred_check
      _
    $region59: #{tpu_custom_call.1} parent=1 // pred_check_branch
      %489 = sbr.rel (0) target = $region61
    $region60: #{tpu_custom_call.1} parent=1 // pred_region
      %490 = dma.done [#allocation10], 1024
    $region61: #{tpu_custom_call.1} parent=1 // pred_fallthru
      _
    %491 = vsyncpa [#allocation3], 1
    %492 = vsyncpa [#allocation6], 1
    %493 = vsyncpa [#allocation4], 1
    %494 = vsyncpa [#allocation10], 1

</llo_original>
